<compile_context>
chip_gen: v7x
topology: tpu7x:2x2x1
jax: 0.10.0
libtpu: 0.0.40
codegen_flags: <defaults>
</compile_context>

<pallas_src>
import functools
import math

import jax
import jax.numpy as jnp
from jax.experimental import pallas as pl
from jax.experimental.pallas import tpu as pltpu

LANE = 128
_TILE_BUDGET_DEFAULT = 3 * 1024 * 1024   # v5e / v6e: ~roofline knee already
_TILE_BUDGET_V7X = 8 * 1024 * 1024       # v7x: amortize per-step overhead


def _sublane_multiple(dtype) -> int:
    """Sublane packing multiple for the dtype (8 / 16 / 32 rows)."""
    itemsize = jnp.dtype(dtype).itemsize
    return {4: 8, 2: 16, 1: 32}.get(itemsize, 8)


def _device_kind() -> str:
    try:
        return jax.devices()[0].device_kind.lower()
    except Exception:  # CPU / interpret fallback
        return ""


def _is_v7x(kind: str) -> bool:
    return "7" in kind


def _round_up(n: int, m: int) -> int:
    return ((n + m - 1) // m) * m


def _chain_jnp(x, layer_fns):
    for fn in layer_fns:
        x = fn(x)
    return x


def _chain_kernel(x_ref, o_ref, *, layer_fns):
    """Apply every layer's elementwise fn in sequence on one VMEM tile."""
    x = x_ref[...]
    for fn in layer_fns:
        x = fn(x)
    o_ref[...] = x


def _pick_block_rows(rows, row_bytes, budget_bytes, sub, multi_tc):
    """Rows per block: big (VMEM budget), sublane-aligned, divisor-preferring."""
    if rows <= sub:
        return rows                                  # full-dim block (legal)
    # On multi-TensorCore chips keep >= 2 grid steps for larger tensors so the
    # "parallel" grid axis can actually shard across cores.
    want_two_steps = multi_tc and rows * row_bytes > (2 << 20)
    if not want_two_steps and rows * row_bytes <= budget_bytes:
        return rows                                  # whole array in one tile
    budget_rows = max(sub, (budget_bytes // row_bytes) // sub * sub)
    cap = budget_rows
    if want_two_steps:
        cap = min(cap, max(sub, _round_up(pl.cdiv(rows, 2), sub)))
    # Prefer the largest sublane-aligned divisor of `rows` <= cap: avoids a
    # short, masked (vst.msk) trailing grid step.
    cand = (cap // sub) * sub
    while cand >= sub:
        if rows % cand == 0:
            return cand
        cand -= sub
    return (cap // sub) * sub


def _apply_chain_pallas(x, layer_fns):
    """Fused elementwise layer chain over a 2-D collapsed view of x."""
    shape, dtype = x.shape, x.dtype
    total = math.prod(shape)
    if total == 0:
        return x

    itemsize = jnp.dtype(dtype).itemsize
    sub = _sublane_multiple(dtype)
    kind = _device_kind()
    multi_tc = _is_v7x(kind)
    budget = _TILE_BUDGET_V7X if multi_tc else _TILE_BUDGET_DEFAULT

    # ---- Choose a 2-D factorization with NO padding / extra HBM passes ----
    if total % LANE == 0:
        # Lane-dense slab: best layout, unmasked stores.
        rows, cols = total // LANE, LANE
    elif total * itemsize <= budget:
        # Small, not 128-aligned: one full-array block (full-dim exception).
        rows, cols = 1, total
    else:
        # Large, not 128-aligned: fold trailing dims into the lane axis while
        # at least `sub` rows of that width still fit in one tile; the block's
        # last dim equals the full collapsed dim (allowed exception).
        cols = 1
        i = len(shape)
        while i > 0 and cols * shape[i - 1] * itemsize * sub <= budget:
            cols *= shape[i - 1]
            i -= 1
        if i == len(shape):
            # Even one sublane-group of the last dim exceeds the tile budget.
            # TODO(synk): tile the lane axis with a raised vmem_limit instead
            # of falling back to a plain fused-XLA elementwise chain.
            return _chain_jnp(x, layer_fns)
        rows = math.prod(shape[:i])

    x2d = x.reshape(rows, cols)
    row_bytes = cols * itemsize
    block_rows = _pick_block_rows(rows, row_bytes, budget, sub, multi_tc)
    grid = (pl.cdiv(rows, block_rows),)

    kernel = functools.partial(_chain_kernel, layer_fns=tuple(layer_fns))

    out2d = pl.pallas_call(
        kernel,
        out_shape=jax.ShapeDtypeStruct((rows, cols), dtype),
        grid_spec=pltpu.PrefetchScalarGridSpec(
            num_scalar_prefetch=0,
            grid=grid,
            in_specs=[pl.BlockSpec((block_rows, cols), lambda i: (i, 0))],
            out_specs=pl.BlockSpec((block_rows, cols), lambda i: (i, 0)),
        ),
        # Pure elementwise map with identical in/out shape & dtype: let the
        # output reuse the input's HBM buffer (lower footprint, no extra copy
        # when the caller donates x).
        input_output_aliases={0: 0},
        compiler_params=pltpu.CompilerParams(
            dimension_semantics=("parallel",),
            # 2 arrays x 2 pipeline buffers + headroom; explicit so v5e's
            # 16 MiB default scoped VMEM never gates the bigger v7x tiles.
            vmem_limit_bytes=4 * budget + (8 << 20),
        ),
        cost_estimate=pl.CostEstimate(
            flops=0,
            transcendentals=0,
            bytes_accessed=2 * rows * cols * itemsize),
    )(x2d)

    return out2d.reshape(shape)


@functools.partial(jax.jit, static_argnames="layer_fns")
def _apply_chain(x, layer_fns):
    """One fused executable: reshape -> fused Pallas chain -> reshape back."""
    # Trace-time guard: the fused flattened path assumes each layer preserves
    # shape and dtype.  (Elementwise-ness itself cannot be checked here.)
    probe = jax.eval_shape(lambda t: _chain_jnp(t, layer_fns),
                           jax.ShapeDtypeStruct(x.shape, x.dtype))
    if probe.shape != x.shape or probe.dtype != x.dtype:
        # TODO(synk): non shape-preserving / non-elementwise subclass layers
        # (conv, norm-over-C, matmul) need dedicated kernels, not this
        # flattened layout; run them as a plain (XLA-fused) chain instead.
        return _chain_jnp(x, layer_fns)
    return _apply_chain_pallas(x, layer_fns)


class Backbone:
    """JAX/Pallas port of the PyTorch Backbone base class.

    `self.layers` mirrors nn.ModuleList(): a list of per-element jnp callables.
    The base class defines none, so forward is the identity.  Subclasses append
    elementwise layer fns; they are fused into a single Pallas kernel.
    """

    def __init__(self):
        self.layers = []  # mirrors: self.layers = nn.ModuleList()

    def forward(self, x):
        # Fast path: the base class (empty layer list) is the identity.
        # Skipping the kernel removes a full HBM read+write for this case.
        if not self.layers:
            return x
        return _apply_chain(x, tuple(self.layers))

    def __call__(self, x):
        return self.forward(x)


if __name__ == "__main__":
    key = jax.random.PRNGKey(0)
    # Small NCHW input consistent with a conv-style backbone.
    x = jax.random.normal(key, (2, 4, 16, 16), dtype=jnp.float32)

    # 1) Base class (empty ModuleList): forward must be the identity.
    base = Backbone()
    y0 = jax.block_until_ready(base(x))
    assert y0.shape == x.shape and y0.dtype == x.dtype
    assert bool(jnp.array_equal(y0, x))

    # 2) Fused Pallas kernel on the 128-aligned path (2*4*16*16 = 2048 elems);
    #    the layer chain composes to the identity.
    chained = Backbone()
    chained.layers.append(lambda v: v * 2.0)
    chained.layers.append(lambda v: v + 1.0)
    chained.layers.append(lambda v: (v - 1.0) * 0.5)
    y1 = jax.block_until_ready(chained(x))
    assert y1.shape == x.shape and y1.dtype == x.dtype
    assert bool(jnp.allclose(y1, x, atol=1e-6))

    # 3) Non-128-aligned element count (2*3*5*7 = 210) exercises the
    #    full-dim-block path (no pad/concat/slice round trip).
    x_odd = jax.random.normal(jax.random.PRNGKey(1), (2, 3, 5, 7), jnp.float32)
    y2 = jax.block_until_ready(chained(x_odd))
    assert y2.shape == x_odd.shape and y2.dtype == x_odd.dtype
    assert bool(jnp.allclose(y2, x_odd, atol=1e-6))

    print("KERNEL_OK")
</pallas_src>

<mosaic_0001>
module attributes {stable_mosaic.version = 11 : i64} {
  func.func @_chain_kernel(%arg0: i32, %arg1: memref<16x128xf32, #tpu.memory_space<vmem>>, %arg2: memref<16x128xf32, #tpu.memory_space<vmem>>) attributes {dimension_semantics = [#tpu.dimension_semantics<parallel>], iteration_bounds = array<i64: 1>, scalar_prefetch = 0 : i64, scratch_operands = 0 : i64, tpu.core_type = #tpu.core_type<tc>, window_params = [{transform_indices = @transform_0, window_bounds = array<i64: 16, 128>}, {transform_indices = @transform_1, window_bounds = array<i64: 16, 128>}]} {
    %c0 = arith.constant 0 : index
    %c0_0 = arith.constant 0 : index
    %0 = vector.load %arg1[%c0, %c0_0] : memref<16x128xf32, #tpu.memory_space<vmem>>, vector<16x128xf32>
    %cst = arith.constant 2.000000e+00 : f32
    %1 = vector.broadcast %cst : f32 to vector<16x128xf32>
    %2 = arith.mulf %0, %1 : vector<16x128xf32>
    %cst_1 = arith.constant 1.000000e+00 : f32
    %3 = vector.broadcast %cst_1 : f32 to vector<16x128xf32>
    %4 = arith.addf %2, %3 : vector<16x128xf32>
    %cst_2 = arith.constant 1.000000e+00 : f32
    %5 = vector.broadcast %cst_2 : f32 to vector<16x128xf32>
    %6 = arith.subf %4, %5 : vector<16x128xf32>
    %cst_3 = arith.constant 5.000000e-01 : f32
    %7 = vector.broadcast %cst_3 : f32 to vector<16x128xf32>
    %8 = arith.mulf %6, %7 : vector<16x128xf32>
    %c0_4 = arith.constant 0 : index
    %c0_5 = arith.constant 0 : index
    %9 = vector.load %arg2[%c0_4, %c0_5] : memref<16x128xf32, #tpu.memory_space<vmem>>, vector<16x128xf32>
    tpu.vector_store %arg2[%c0_4, %c0_5], %8 {strides = array<i32>} : memref<16x128xf32, #tpu.memory_space<vmem>>, vector<16x128xf32>,
    return
  }
  func.func @transform_0(%arg0: i32) -> (i32, i32) {
    %c0_i32 = arith.constant 0 : i32
    %c0_i32_0 = arith.constant 0 : i32
    return %arg0, %c0_i32 : i32, i32
  }
  func.func @transform_1(%arg0: i32) -> (i32, i32) {
    %c0_i32 = arith.constant 0 : i32
    %c0_i32_0 = arith.constant 0 : i32
    return %arg0, %c0_i32 : i32, i32
  }
}

</mosaic_0001>

<llo_original>
// kernel: _apply_chain.1
$region0: #{_apply_chain.1}
  #allocation0 [shape = 'u32[]', space=smem, size = 0x4, offset = 0x4, fixed_abs, tag = 'smem constant byte address 0x4 - core index']
  #allocation1 [shape = 'u32[144,128]{1,0:T(1,128)}', space=vmem, size = 0x12000, scoped, tag = 'internal scratch']
  %s0 = inlined_call_operand.vmem [shape: f32[16,128], index: 0, kind: input, shape index: {}, may-alias: {0,1}]
  %s1 = inlined_call_operand.vmem [shape: f32[16,128], index: 1, kind: output, shape index: {}, may-alias: {0,1}]
  %s2 = sld [smem:[#allocation0]]
  $region14: #{_apply_chain.1} parent=0
    _
  %s4 = ssub.s32 1, %s2
  %s5 = scalar_select 0, %s4, %s2
  // Predicated region
  $region2: #{_apply_chain.1} parent=0 // pred_check
    _
  $region3: #{_apply_chain.1} parent=0 // pred_check_branch
    %7 = sbr.rel (0) target = $region5
  $region4: #{_apply_chain.1} parent=0 // pred_region
    _
  $region5: #{_apply_chain.1} parent=0 // pred_fallthru
    _
  %v8 = vld [vmem:[%s0] sm:$0xff]
  %v9 = vld [vmem:[%s0 + $0x8] sm:$0xff]
  %v10 = vmul.f32 %v8, 2.0
  %v11 = vmul.f32 %v9, 2.0
  %v12 = vadd.f32 %v10, 1.0
  %v13 = vadd.f32 %v11, 1.0
  %v14 = vsub.f32 %v12, 1.0
  %v15 = vsub.f32 %v13, 1.0
  %v16 = vmul.f32 %v14, 0.5
  %v17 = vmul.f32 %v15, 0.5
  %18 = vst [vmem:[%s1] sm:$0xff] %v16
  %19 = vst [vmem:[%s1 + $0x8] sm:$0xff] %v17
  // Predicated region
  $region6: #{_apply_chain.1} parent=0 // pred_check
    _
  $region7: #{_apply_chain.1} parent=0 // pred_check_branch
    %21 = sbr.rel (0) target = $region9
  $region8: #{_apply_chain.1} parent=0 // pred_region
    _
  $region9: #{_apply_chain.1} parent=0 // pred_fallthru
    _
  // Predicated region
  $region10: #{_apply_chain.1} parent=0 // pred_check
    _
  $region11: #{_apply_chain.1} parent=0 // pred_check_branch
    %23 = sbr.rel (0) target = $region13
  $region12: #{_apply_chain.1} parent=0 // pred_region
    _
  $region13: #{_apply_chain.1} parent=0 // pred_fallthru
    _

</llo_original>
